<compile_context>
chip_gen: v6e
topology: v6e:2x2x1
jax: 0.10.0
libtpu: 0.0.40
codegen_flags: <defaults>
</compile_context>

<pallas_src>
import jax
import jax.numpy as jnp
from jax import lax
from jax.experimental import pallas as pl
from jax.experimental.pallas import tpu as pltpu

# -------------------- configuration (small, deterministic) --------------------
BATCH = 8
INPUT_DIM = 32
FCNN_DIM = 64
N_JOINTS = 6
OUT_DIM = 6 * N_JOINTS


# -------------------- fused Pallas kernel: MLP + rot6d -> rotmat --------------
def _rotnet_kernel(x_ref, w1_ref, w23_ref, b123_ref, w4_ref, b4_ref,
                   w4sel_ref, b4sel_ref, rot6d_ref, rotmat_ref):
    f32 = jnp.float32
    bf16 = jnp.bfloat16
    H = FCNN_DIM

    # ---- fused MLP: Linear -> ReLU -> Linear -> ReLU -> Linear -> ReLU -------
    xb = x_ref[...].astype(bf16)
    h = jnp.dot(xb, w1_ref[...], preferred_element_type=f32) + b123_ref[0:1, :]
    h = jnp.maximum(h, 0.0)
    h = jnp.dot(h.astype(bf16), w23_ref[0:H, :],
                preferred_element_type=f32) + b123_ref[1:2, :]
    h = jnp.maximum(h, 0.0)
    h = jnp.dot(h.astype(bf16), w23_ref[H:2 * H, :],
                preferred_element_type=f32) + b123_ref[2:3, :]
    z = jnp.maximum(h, 0.0)          # RotNet: relu(FCNN(x))
    zb = z.astype(bf16)

    # rot6d in the original (B, 6*J) layout, final linear layer.
    rot6d_ref[...] = (jnp.dot(zb, w4_ref[...], preferred_element_type=f32)
                      + b4_ref[...])

    # Per-component (B, J) blocks via column-selection matmuls: w4sel[c] holds
    # the same w4 columns re-gathered per component (a1x,a1y,a1z,a2x,a2y,a2z),
    # so no unaligned lane slicing is needed in-kernel.
    comps = []
    for c in range(6):
        comps.append(jnp.dot(zb, w4sel_ref[c], preferred_element_type=f32)
                     + b4sel_ref[c])
    a1x, a1y, a1z, a2x, a2y, a2z = comps

    # ---- Gram-Schmidt: 6D rep -> rotation matrix -----------------------------
    eps = 1e-12                       # matches torch F.normalize clamp_min
    inv_n1 = lax.rsqrt(jnp.maximum(a1x * a1x + a1y * a1y + a1z * a1z, eps * eps))
    b1x = a1x * inv_n1; b1y = a1y * inv_n1; b1z = a1z * inv_n1

    d = b1x * a2x + b1y * a2y + b1z * a2z
    u2x = a2x - d * b1x; u2y = a2y - d * b1y; u2z = a2z - d * b1z
    inv_n2 = lax.rsqrt(jnp.maximum(u2x * u2x + u2y * u2y + u2z * u2z, eps * eps))
    b2x = u2x * inv_n2; b2y = u2y * inv_n2; b2z = u2z * inv_n2

    # b3 = b1 x b2
    b3x = b1y * b2z - b1z * b2y
    b3y = b1z * b2x - b1x * b2z
    b3z = b1x * b2y - b1y * b2x

    # Plane m = 3*i + k holds R[i, k] (R = stack([b1, b2, b3], axis=-1)).
    # Single stacked store instead of nine partial stores.
    rotmat_ref[...] = jnp.stack(
        [b1x, b2x, b3x, b1y, b2y, b3y, b1z, b2z, b3z], axis=0)


def _run_fused(x, params):
    w1, w23, b123, w4, b4, w4sel, b4sel = params
    B = x.shape[0]
    return pl.pallas_call(
        _rotnet_kernel,
        out_shape=(jax.ShapeDtypeStruct((B, OUT_DIM), jnp.float32),
                   jax.ShapeDtypeStruct((9, B, N_JOINTS), jnp.float32)),
        grid=(1,),
        in_specs=[
            pl.BlockSpec((B, INPUT_DIM), lambda i: (0, 0)),
            pl.BlockSpec((INPUT_DIM, FCNN_DIM), lambda i: (0, 0)),
            pl.BlockSpec((2 * FCNN_DIM, FCNN_DIM), lambda i: (0, 0)),
            pl.BlockSpec((3, FCNN_DIM), lambda i: (0, 0)),
            pl.BlockSpec((FCNN_DIM, OUT_DIM), lambda i: (0, 0)),
            pl.BlockSpec((1, OUT_DIM), lambda i: (0, 0)),
            pl.BlockSpec((6, FCNN_DIM, N_JOINTS), lambda i: (0, 0, 0)),
            pl.BlockSpec((6, 1, N_JOINTS), lambda i: (0, 0, 0)),
        ],
        out_specs=(pl.BlockSpec((B, OUT_DIM), lambda i: (0, 0)),
                   pl.BlockSpec((9, B, N_JOINTS), lambda i: (0, 0, 0))),
        compiler_params=pltpu.CompilerParams(dimension_semantics=("arbitrary",)),
    )(x, w1, w23, b123, w4, b4, w4sel, b4sel)


# -------------------- rotmat planes -> angle-axis (jitted JAX glue) -----------
def _planes_to_angle_axis(m):
    """m: (9, B, J) planes, plane 3*i+k = R[i,k]. Returns (B, J, 3)."""
    R00, R01, R02, R10, R11, R12, R20, R21, R22 = [m[i] for i in range(9)]
    eps = 1e-6

    t0 = 1.0 + R00 - R11 - R22
    t1 = 1.0 - R00 + R11 - R22
    t2 = 1.0 - R00 - R11 + R22
    t3 = 1.0 + R00 + R11 + R22

    mask_d2 = R22 < eps
    mask_d0_d1 = R00 > R11
    mask_d0_nd1 = R00 < -R11
    c0 = (mask_d2 & mask_d0_d1).astype(m.dtype)
    c1 = (mask_d2 & (~mask_d0_d1)).astype(m.dtype)
    c2 = ((~mask_d2) & mask_d0_nd1).astype(m.dtype)
    c3 = ((~mask_d2) & (~mask_d0_nd1)).astype(m.dtype)

    qw = (R21 - R12) * c0 + (R02 - R20) * c1 + (R10 - R01) * c2 + t3 * c3
    qx = t0 * c0 + (R10 + R01) * c1 + (R02 + R20) * c2 + (R21 - R12) * c3
    qy = (R10 + R01) * c0 + t1 * c1 + (R21 + R12) * c2 + (R02 - R20) * c3
    qz = (R02 + R20) * c0 + (R21 + R12) * c1 + t2 * c2 + (R10 - R01) * c3
    t_sel = t0 * c0 + t1 * c1 + t2 * c2 + t3 * c3

    scale = 0.5 / jnp.sqrt(t_sel)
    qw = qw * scale; qx = qx * scale; qy = qy * scale; qz = qz * scale

    sin_sq = qx * qx + qy * qy + qz * qz
    sin_t = jnp.sqrt(sin_sq)
    cos_t = qw
    two_theta = 2.0 * jnp.where(cos_t < 0.0,
                                jnp.arctan2(-sin_t, -cos_t),
                                jnp.arctan2(sin_t, cos_t))
    sin_safe = jnp.where(sin_sq > 0.0, sin_t, 1.0)   # safe denominator (no inf/NaN)
    k = jnp.where(sin_sq > 0.0, two_theta / sin_safe, 2.0 * jnp.ones_like(sin_t))

    aa = jnp.stack([qx * k, qy * k, qz * k], axis=-1)
    aa = jnp.where(jnp.isnan(aa), 0.0, aa)
    return aa


# -------------------- RotNet forward (jitted end-to-end) ----------------------
@jax.jit
def rotnet_forward(x, params):
    B = x.shape[0]
    rot6d, m = _run_fused(x, params)                       # (B,36), (9,B,J)
    # m[3*i+k, b, j] = R[i,k] of joint j -> (B, J, 3, 3)
    rotmat = jnp.transpose(m, (1, 2, 0)).reshape(B, N_JOINTS, 3, 3)
    pose = _planes_to_angle_axis(m).reshape(B, 3 * N_JOINTS)
    return {'rot6d': rot6d, 'rotmat': rotmat, 'pose': pose}


# -------------------- deterministic parameter init + packing ------------------
def init_params(key):
    ks = jax.random.split(key, 8)

    def xavier(k, fan_in, fan_out, gain=1.0):
        s = gain * jnp.sqrt(6.0 / (fan_in + fan_out))
        return jax.random.uniform(k, (fan_in, fan_out), jnp.float32, -s, s)

    w1 = xavier(ks[0], INPUT_DIM, FCNN_DIM)
    b1 = jax.random.uniform(ks[1], (1, FCNN_DIM), jnp.float32, -0.1, 0.1)
    w2 = xavier(ks[2], FCNN_DIM, FCNN_DIM)
    b2 = jax.random.uniform(ks[3], (1, FCNN_DIM), jnp.float32, -0.1, 0.1)
    w3 = xavier(ks[4], FCNN_DIM, FCNN_DIM)
    b3 = jax.random.uniform(ks[5], (1, FCNN_DIM), jnp.float32, -0.1, 0.1)
    # last layer: xavier with gain 0.01 (init_last_layer_zero=False branch)
    w4 = xavier(ks[6], FCNN_DIM, OUT_DIM, gain=0.01)
    b4 = jax.random.uniform(ks[7], (1, OUT_DIM), jnp.float32, -0.5, 0.5)

    # ---- pack for the fused kernel -------------------------------------------
    w23 = jnp.concatenate([w2, w3], axis=0)                      # (128, 64)
    b123 = jnp.concatenate([b1, b2, b3], axis=0)                 # (3, 64)

    # component-selection gather of w4 columns:
    # comp order [a1x,a1y,a1z,a2x,a2y,a2z] <-> per-joint offsets [0,2,4,1,3,5]
    comp_off = jnp.array([0, 2, 4, 1, 3, 5], dtype=jnp.int32)
    cols = 6 * jnp.arange(N_JOINTS, dtype=jnp.int32)[None, :] + comp_off[:, None]
    w4sel = jnp.transpose(w4[:, cols], (1, 0, 2))                # (6, 64, J)
    b4sel = b4[0, cols][:, None, :]                              # (6, 1, J)

    bf16 = jnp.bfloat16
    return (w1.astype(bf16), w23.astype(bf16), b123,
            w4.astype(bf16), b4, w4sel.astype(bf16), b4sel)


if __name__ == "__main__":
    key = jax.random.PRNGKey(0)
    k_x, k_p = jax.random.split(key)
    x = jax.random.normal(k_x, (BATCH, INPUT_DIM), dtype=jnp.float32)
    params = init_params(k_p)

    out = rotnet_forward(x, params)
    jax.block_until_ready(out)

    assert out['rot6d'].shape == (BATCH, OUT_DIM)
    assert out['rotmat'].shape == (BATCH, N_JOINTS, 3, 3)
    assert out['pose'].shape == (BATCH, 3 * N_JOINTS)

    # light sanity: Gram-Schmidt output must be orthonormal, pose finite.
    R = out['rotmat']
    rtr = jnp.matmul(R, jnp.swapaxes(R, -1, -2))
    err = jnp.max(jnp.abs(rtr - jnp.eye(3, dtype=R.dtype)))
    assert float(err) < 1e-4, f"rotmat not orthonormal, err={float(err)}"
    assert bool(jnp.all(jnp.isfinite(out['pose'])))

    print("KERNEL_OK")
</pallas_src>

<mosaic_0001>
module attributes {stable_mosaic.version = 11 : i64} {
  func.func @_rotnet_kernel(%arg0: i32, %arg1: memref<8x32xf32, #tpu.memory_space<vmem>>, %arg2: memref<32x64xbf16, #tpu.memory_space<vmem>>, %arg3: memref<128x64xbf16, #tpu.memory_space<vmem>>, %arg4: memref<3x64xf32, #tpu.memory_space<vmem>>, %arg5: memref<64x36xbf16, #tpu.memory_space<vmem>>, %arg6: memref<1x36xf32, #tpu.memory_space<vmem>>, %arg7: memref<6x64x6xbf16, #tpu.memory_space<vmem>>, %arg8: memref<6x1x6xf32, #tpu.memory_space<vmem>>, %arg9: memref<8x36xf32, #tpu.memory_space<vmem>>, %arg10: memref<9x8x6xf32, #tpu.memory_space<vmem>>) attributes {dimension_semantics = [#tpu.dimension_semantics<arbitrary>], iteration_bounds = array<i64: 1>, scalar_prefetch = 0 : i64, scratch_operands = 0 : i64, tpu.core_type = #tpu.core_type<tc>, window_params = [{pipeline_mode = #tpu.pipeline_mode<synchronous>, transform_indices = @transform_0, window_bounds = array<i64: 8, 32>}, {pipeline_mode = #tpu.pipeline_mode<synchronous>, transform_indices = @transform_1, window_bounds = array<i64: 32, 64>}, {pipeline_mode = #tpu.pipeline_mode<synchronous>, transform_indices = @transform_2, window_bounds = array<i64: 128, 64>}, {pipeline_mode = #tpu.pipeline_mode<synchronous>, transform_indices = @transform_3, window_bounds = array<i64: 3, 64>}, {pipeline_mode = #tpu.pipeline_mode<synchronous>, transform_indices = @transform_4, window_bounds = array<i64: 64, 36>}, {pipeline_mode = #tpu.pipeline_mode<synchronous>, transform_indices = @transform_5, window_bounds = array<i64: 1, 36>}, {pipeline_mode = #tpu.pipeline_mode<synchronous>, transform_indices = @transform_6, window_bounds = array<i64: 6, 64, 6>}, {pipeline_mode = #tpu.pipeline_mode<synchronous>, transform_indices = @transform_7, window_bounds = array<i64: 6, 1, 6>}, {pipeline_mode = #tpu.pipeline_mode<synchronous>, transform_indices = @transform_8, window_bounds = array<i64: 8, 36>}, {pipeline_mode = #tpu.pipeline_mode<synchronous>, transform_indices = @transform_9, window_bounds = array<i64: 9, 8, 6>}]} {
    %c0 = arith.constant 0 : index
    %c0_0 = arith.constant 0 : index
    %0 = vector.load %arg1[%c0, %c0_0] : memref<8x32xf32, #tpu.memory_space<vmem>>, vector<8x32xf32>
    %1 = arith.truncf %0 : vector<8x32xf32> to vector<8x32xbf16>
    %c0_1 = arith.constant 0 : index
    %c0_2 = arith.constant 0 : index
    %2 = vector.load %arg2[%c0_1, %c0_2] : memref<32x64xbf16, #tpu.memory_space<vmem>>, vector<32x64xbf16>
    %cst = arith.constant dense<0.000000e+00> : vector<8x64xf32>
    %3 = tpu.matmul %1, %2, %cst {dimension_numbers = #tpu.dot_dimension_numbers<[1], [0], [0], [1], [0, 0, 1, 1], [], []>} : vector<8x32xbf16>, vector<32x64xbf16>, vector<8x64xf32> -> vector<8x64xf32>
    %c0_3 = arith.constant 0 : index
    %c0_4 = arith.constant 0 : index
    %4 = vector.load %arg4[%c0_3, %c0_4] : memref<3x64xf32, #tpu.memory_space<vmem>>, vector<1x64xf32>
    %5 = vector.broadcast %4 : vector<1x64xf32> to vector<8x64xf32>
    %6 = arith.addf %3, %5 : vector<8x64xf32>
    %cst_5 = arith.constant 0.000000e+00 : f32
    %7 = vector.broadcast %cst_5 : f32 to vector<8x64xf32>
    %8 = arith.maximumf %6, %7 : vector<8x64xf32>
    %9 = arith.truncf %8 : vector<8x64xf32> to vector<8x64xbf16>
    %c0_6 = arith.constant 0 : index
    %c0_7 = arith.constant 0 : index
    %10 = vector.load %arg3[%c0_6, %c0_7] : memref<128x64xbf16, #tpu.memory_space<vmem>>, vector<64x64xbf16>
    %cst_8 = arith.constant dense<0.000000e+00> : vector<8x64xf32>
    %11 = tpu.matmul %9, %10, %cst_8 {dimension_numbers = #tpu.dot_dimension_numbers<[1], [0], [0], [1], [0, 0, 1, 1], [], []>} : vector<8x64xbf16>, vector<64x64xbf16>, vector<8x64xf32> -> vector<8x64xf32>
    %c1 = arith.constant 1 : index
    %c0_9 = arith.constant 0 : index
    %12 = vector.load %arg4[%c1, %c0_9] : memref<3x64xf32, #tpu.memory_space<vmem>>, vector<1x64xf32>
    %13 = vector.broadcast %12 : vector<1x64xf32> to vector<8x64xf32>
    %14 = arith.addf %11, %13 : vector<8x64xf32>
    %cst_10 = arith.constant 0.000000e+00 : f32
    %15 = vector.broadcast %cst_10 : f32 to vector<8x64xf32>
    %16 = arith.maximumf %14, %15 : vector<8x64xf32>
    %17 = arith.truncf %16 : vector<8x64xf32> to vector<8x64xbf16>
    %c64 = arith.constant 64 : index
    %c0_11 = arith.constant 0 : index
    %18 = vector.load %arg3[%c64, %c0_11] : memref<128x64xbf16, #tpu.memory_space<vmem>>, vector<64x64xbf16>
    %cst_12 = arith.constant dense<0.000000e+00> : vector<8x64xf32>
    %19 = tpu.matmul %17, %18, %cst_12 {dimension_numbers = #tpu.dot_dimension_numbers<[1], [0], [0], [1], [0, 0, 1, 1], [], []>} : vector<8x64xbf16>, vector<64x64xbf16>, vector<8x64xf32> -> vector<8x64xf32>
    %c2 = arith.constant 2 : index
    %c0_13 = arith.constant 0 : index
    %20 = vector.load %arg4[%c2, %c0_13] : memref<3x64xf32, #tpu.memory_space<vmem>>, vector<1x64xf32>
    %21 = vector.broadcast %20 : vector<1x64xf32> to vector<8x64xf32>
    %22 = arith.addf %19, %21 : vector<8x64xf32>
    %cst_14 = arith.constant 0.000000e+00 : f32
    %23 = vector.broadcast %cst_14 : f32 to vector<8x64xf32>
    %24 = arith.maximumf %22, %23 : vector<8x64xf32>
    %25 = arith.truncf %24 : vector<8x64xf32> to vector<8x64xbf16>
    %c0_15 = arith.constant 0 : index
    %c0_16 = arith.constant 0 : index
    %26 = vector.load %arg5[%c0_15, %c0_16] : memref<64x36xbf16, #tpu.memory_space<vmem>>, vector<64x36xbf16>
    %cst_17 = arith.constant dense<0.000000e+00> : vector<8x36xf32>
    %27 = tpu.matmul %25, %26, %cst_17 {dimension_numbers = #tpu.dot_dimension_numbers<[1], [0], [0], [1], [0, 0, 1, 1], [], []>} : vector<8x64xbf16>, vector<64x36xbf16>, vector<8x36xf32> -> vector<8x36xf32>
    %c0_18 = arith.constant 0 : index
    %c0_19 = arith.constant 0 : index
    %28 = vector.load %arg6[%c0_18, %c0_19] : memref<1x36xf32, #tpu.memory_space<vmem>>, vector<1x36xf32>
    %29 = vector.broadcast %28 : vector<1x36xf32> to vector<8x36xf32>
    %30 = arith.addf %27, %29 : vector<8x36xf32>
    %c0_20 = arith.constant 0 : index
    %c0_21 = arith.constant 0 : index
    %31 = vector.load %arg9[%c0_20, %c0_21] : memref<8x36xf32, #tpu.memory_space<vmem>>, vector<8x36xf32>
    tpu.vector_store %arg9[%c0_20, %c0_21], %30 {strides = array<i32>} : memref<8x36xf32, #tpu.memory_space<vmem>>, vector<8x36xf32>,
    %c0_22 = arith.constant 0 : index
    %c0_23 = arith.constant 0 : index
    %c0_24 = arith.constant 0 : index
    %32 = vector.load %arg7[%c0_22, %c0_23, %c0_24] : memref<6x64x6xbf16, #tpu.memory_space<vmem>>, vector<1x64x6xbf16>
    %33 = vector.shape_cast %32 : vector<1x64x6xbf16> to vector<64x6xbf16>
    %cst_25 = arith.constant dense<0.000000e+00> : vector<8x6xf32>
    %34 = tpu.matmul %25, %33, %cst_25 {dimension_numbers = #tpu.dot_dimension_numbers<[1], [0], [0], [1], [0, 0, 1, 1], [], []>} : vector<8x64xbf16>, vector<64x6xbf16>, vector<8x6xf32> -> vector<8x6xf32>
    %c0_26 = arith.constant 0 : index
    %c0_27 = arith.constant 0 : index
    %c0_28 = arith.constant 0 : index
    %35 = vector.load %arg8[%c0_26, %c0_27, %c0_28] : memref<6x1x6xf32, #tpu.memory_space<vmem>>, vector<1x1x6xf32>
    %36 = vector.shape_cast %35 : vector<1x1x6xf32> to vector<1x6xf32>
    %37 = vector.broadcast %36 : vector<1x6xf32> to vector<8x6xf32>
    %38 = arith.addf %34, %37 : vector<8x6xf32>
    %c1_29 = arith.constant 1 : index
    %c0_30 = arith.constant 0 : index
    %c0_31 = arith.constant 0 : index
    %39 = vector.load %arg7[%c1_29, %c0_30, %c0_31] : memref<6x64x6xbf16, #tpu.memory_space<vmem>>, vector<1x64x6xbf16>
    %40 = vector.shape_cast %39 : vector<1x64x6xbf16> to vector<64x6xbf16>
    %cst_32 = arith.constant dense<0.000000e+00> : vector<8x6xf32>
    %41 = tpu.matmul %25, %40, %cst_32 {dimension_numbers = #tpu.dot_dimension_numbers<[1], [0], [0], [1], [0, 0, 1, 1], [], []>} : vector<8x64xbf16>, vector<64x6xbf16>, vector<8x6xf32> -> vector<8x6xf32>
    %c1_33 = arith.constant 1 : index
    %c0_34 = arith.constant 0 : index
    %c0_35 = arith.constant 0 : index
    %42 = vector.load %arg8[%c1_33, %c0_34, %c0_35] : memref<6x1x6xf32, #tpu.memory_space<vmem>>, vector<1x1x6xf32>
    %43 = vector.shape_cast %42 : vector<1x1x6xf32> to vector<1x6xf32>
    %44 = vector.broadcast %43 : vector<1x6xf32> to vector<8x6xf32>
    %45 = arith.addf %41, %44 : vector<8x6xf32>
    %c2_36 = arith.constant 2 : index
    %c0_37 = arith.constant 0 : index
    %c0_38 = arith.constant 0 : index
    %46 = vector.load %arg7[%c2_36, %c0_37, %c0_38] : memref<6x64x6xbf16, #tpu.memory_space<vmem>>, vector<1x64x6xbf16>
    %47 = vector.shape_cast %46 : vector<1x64x6xbf16> to vector<64x6xbf16>
    %cst_39 = arith.constant dense<0.000000e+00> : vector<8x6xf32>
    %48 = tpu.matmul %25, %47, %cst_39 {dimension_numbers = #tpu.dot_dimension_numbers<[1], [0], [0], [1], [0, 0, 1, 1], [], []>} : vector<8x64xbf16>, vector<64x6xbf16>, vector<8x6xf32> -> vector<8x6xf32>
    %c2_40 = arith.constant 2 : index
    %c0_41 = arith.constant 0 : index
    %c0_42 = arith.constant 0 : index
    %49 = vector.load %arg8[%c2_40, %c0_41, %c0_42] : memref<6x1x6xf32, #tpu.memory_space<vmem>>, vector<1x1x6xf32>
    %50 = vector.shape_cast %49 : vector<1x1x6xf32> to vector<1x6xf32>
    %51 = vector.broadcast %50 : vector<1x6xf32> to vector<8x6xf32>
    %52 = arith.addf %48, %51 : vector<8x6xf32>
    %c3 = arith.constant 3 : index
    %c0_43 = arith.constant 0 : index
    %c0_44 = arith.constant 0 : index
    %53 = vector.load %arg7[%c3, %c0_43, %c0_44] : memref<6x64x6xbf16, #tpu.memory_space<vmem>>, vector<1x64x6xbf16>
    %54 = vector.shape_cast %53 : vector<1x64x6xbf16> to vector<64x6xbf16>
    %cst_45 = arith.constant dense<0.000000e+00> : vector<8x6xf32>
    %55 = tpu.matmul %25, %54, %cst_45 {dimension_numbers = #tpu.dot_dimension_numbers<[1], [0], [0], [1], [0, 0, 1, 1], [], []>} : vector<8x64xbf16>, vector<64x6xbf16>, vector<8x6xf32> -> vector<8x6xf32>
    %c3_46 = arith.constant 3 : index
    %c0_47 = arith.constant 0 : index
    %c0_48 = arith.constant 0 : index
    %56 = vector.load %arg8[%c3_46, %c0_47, %c0_48] : memref<6x1x6xf32, #tpu.memory_space<vmem>>, vector<1x1x6xf32>
    %57 = vector.shape_cast %56 : vector<1x1x6xf32> to vector<1x6xf32>
    %58 = vector.broadcast %57 : vector<1x6xf32> to vector<8x6xf32>
    %59 = arith.addf %55, %58 : vector<8x6xf32>
    %c4 = arith.constant 4 : index
    %c0_49 = arith.constant 0 : index
    %c0_50 = arith.constant 0 : index
    %60 = vector.load %arg7[%c4, %c0_49, %c0_50] : memref<6x64x6xbf16, #tpu.memory_space<vmem>>, vector<1x64x6xbf16>
    %61 = vector.shape_cast %60 : vector<1x64x6xbf16> to vector<64x6xbf16>
    %cst_51 = arith.constant dense<0.000000e+00> : vector<8x6xf32>
    %62 = tpu.matmul %25, %61, %cst_51 {dimension_numbers = #tpu.dot_dimension_numbers<[1], [0], [0], [1], [0, 0, 1, 1], [], []>} : vector<8x64xbf16>, vector<64x6xbf16>, vector<8x6xf32> -> vector<8x6xf32>
    %c4_52 = arith.constant 4 : index
    %c0_53 = arith.constant 0 : index
    %c0_54 = arith.constant 0 : index
    %63 = vector.load %arg8[%c4_52, %c0_53, %c0_54] : memref<6x1x6xf32, #tpu.memory_space<vmem>>, vector<1x1x6xf32>
    %64 = vector.shape_cast %63 : vector<1x1x6xf32> to vector<1x6xf32>
    %65 = vector.broadcast %64 : vector<1x6xf32> to vector<8x6xf32>
    %66 = arith.addf %62, %65 : vector<8x6xf32>
    %c5 = arith.constant 5 : index
    %c0_55 = arith.constant 0 : index
    %c0_56 = arith.constant 0 : index
    %67 = vector.load %arg7[%c5, %c0_55, %c0_56] : memref<6x64x6xbf16, #tpu.memory_space<vmem>>, vector<1x64x6xbf16>
    %68 = vector.shape_cast %67 : vector<1x64x6xbf16> to vector<64x6xbf16>
    %cst_57 = arith.constant dense<0.000000e+00> : vector<8x6xf32>
    %69 = tpu.matmul %25, %68, %cst_57 {dimension_numbers = #tpu.dot_dimension_numbers<[1], [0], [0], [1], [0, 0, 1, 1], [], []>} : vector<8x64xbf16>, vector<64x6xbf16>, vector<8x6xf32> -> vector<8x6xf32>
    %c5_58 = arith.constant 5 : index
    %c0_59 = arith.constant 0 : index
    %c0_60 = arith.constant 0 : index
    %70 = vector.load %arg8[%c5_58, %c0_59, %c0_60] : memref<6x1x6xf32, #tpu.memory_space<vmem>>, vector<1x1x6xf32>
    %71 = vector.shape_cast %70 : vector<1x1x6xf32> to vector<1x6xf32>
    %72 = vector.broadcast %71 : vector<1x6xf32> to vector<8x6xf32>
    %73 = arith.addf %69, %72 : vector<8x6xf32>
    %74 = arith.mulf %38, %38 : vector<8x6xf32>
    %75 = arith.mulf %45, %45 : vector<8x6xf32>
    %76 = arith.addf %74, %75 : vector<8x6xf32>
    %77 = arith.mulf %52, %52 : vector<8x6xf32>
    %78 = arith.addf %76, %77 : vector<8x6xf32>
    %cst_61 = arith.constant 1.000000e-24 : f32
    %79 = vector.broadcast %cst_61 : f32 to vector<8x6xf32>
    %80 = arith.maximumf %78, %79 : vector<8x6xf32>
    %81 = math.rsqrt %80 : vector<8x6xf32>
    %82 = arith.mulf %38, %81 : vector<8x6xf32>
    %83 = arith.mulf %45, %81 : vector<8x6xf32>
    %84 = arith.mulf %52, %81 : vector<8x6xf32>
    %85 = arith.mulf %82, %59 : vector<8x6xf32>
    %86 = arith.mulf %83, %66 : vector<8x6xf32>
    %87 = arith.addf %85, %86 : vector<8x6xf32>
    %88 = arith.mulf %84, %73 : vector<8x6xf32>
    %89 = arith.addf %87, %88 : vector<8x6xf32>
    %90 = arith.mulf %89, %82 : vector<8x6xf32>
    %91 = arith.subf %59, %90 : vector<8x6xf32>
    %92 = arith.mulf %89, %83 : vector<8x6xf32>
    %93 = arith.subf %66, %92 : vector<8x6xf32>
    %94 = arith.mulf %89, %84 : vector<8x6xf32>
    %95 = arith.subf %73, %94 : vector<8x6xf32>
    %96 = arith.mulf %91, %91 : vector<8x6xf32>
    %97 = arith.mulf %93, %93 : vector<8x6xf32>
    %98 = arith.addf %96, %97 : vector<8x6xf32>
    %99 = arith.mulf %95, %95 : vector<8x6xf32>
    %100 = arith.addf %98, %99 : vector<8x6xf32>
    %cst_62 = arith.constant 1.000000e-24 : f32
    %101 = vector.broadcast %cst_62 : f32 to vector<8x6xf32>
    %102 = arith.maximumf %100, %101 : vector<8x6xf32>
    %103 = math.rsqrt %102 : vector<8x6xf32>
    %104 = arith.mulf %91, %103 : vector<8x6xf32>
    %105 = arith.mulf %93, %103 : vector<8x6xf32>
    %106 = arith.mulf %95, %103 : vector<8x6xf32>
    %107 = arith.mulf %83, %106 : vector<8x6xf32>
    %108 = arith.mulf %84, %105 : vector<8x6xf32>
    %109 = arith.subf %107, %108 : vector<8x6xf32>
    %110 = arith.mulf %84, %104 : vector<8x6xf32>
    %111 = arith.mulf %82, %106 : vector<8x6xf32>
    %112 = arith.subf %110, %111 : vector<8x6xf32>
    %113 = arith.mulf %82, %105 : vector<8x6xf32>
    %114 = arith.mulf %83, %104 : vector<8x6xf32>
    %115 = arith.subf %113, %114 : vector<8x6xf32>
    %116 = vector.shape_cast %82 : vector<8x6xf32> to vector<1x8x6xf32>
    %117 = vector.shape_cast %104 : vector<8x6xf32> to vector<1x8x6xf32>
    %118 = vector.shape_cast %109 : vector<8x6xf32> to vector<1x8x6xf32>
    %119 = vector.shape_cast %83 : vector<8x6xf32> to vector<1x8x6xf32>
    %120 = vector.shape_cast %105 : vector<8x6xf32> to vector<1x8x6xf32>
    %121 = vector.shape_cast %112 : vector<8x6xf32> to vector<1x8x6xf32>
    %122 = vector.shape_cast %84 : vector<8x6xf32> to vector<1x8x6xf32>
    %123 = vector.shape_cast %106 : vector<8x6xf32> to vector<1x8x6xf32>
    %124 = vector.shape_cast %115 : vector<8x6xf32> to vector<1x8x6xf32>
    %125 = tpu.concatenate %116, %117, %118, %119, %120, %121, %122, %123, %124 in 0 : vector<1x8x6xf32>, vector<1x8x6xf32>, vector<1x8x6xf32>, vector<1x8x6xf32>, vector<1x8x6xf32>, vector<1x8x6xf32>, vector<1x8x6xf32>, vector<1x8x6xf32>, vector<1x8x6xf32> -> vector<9x8x6xf32>
    %c0_63 = arith.constant 0 : index
    %c0_64 = arith.constant 0 : index
    %c0_65 = arith.constant 0 : index
    %126 = vector.load %arg10[%c0_63, %c0_64, %c0_65] : memref<9x8x6xf32, #tpu.memory_space<vmem>>, vector<9x8x6xf32>
    tpu.vector_store %arg10[%c0_63, %c0_64, %c0_65], %125 {strides = array<i32>} : memref<9x8x6xf32, #tpu.memory_space<vmem>>, vector<9x8x6xf32>,
    return
  }
  func.func @transform_0(%arg0: i32) -> (i32, i32) {
    %c0_i32 = arith.constant 0 : i32
    %c0_i32_0 = arith.constant 0 : i32
    %c0_i32_1 = arith.constant 0 : i32
    return %c0_i32, %c0_i32_0 : i32, i32
  }
  func.func @transform_1(%arg0: i32) -> (i32, i32) {
    %c0_i32 = arith.constant 0 : i32
    %c0_i32_0 = arith.constant 0 : i32
    %c0_i32_1 = arith.constant 0 : i32
    return %c0_i32, %c0_i32_0 : i32, i32
  }
  func.func @transform_2(%arg0: i32) -> (i32, i32) {
    %c0_i32 = arith.constant 0 : i32
    %c0_i32_0 = arith.constant 0 : i32
    %c0_i32_1 = arith.constant 0 : i32
    return %c0_i32, %c0_i32_0 : i32, i32
  }
  func.func @transform_3(%arg0: i32) -> (i32, i32) {
    %c0_i32 = arith.constant 0 : i32
    %c0_i32_0 = arith.constant 0 : i32
    %c0_i32_1 = arith.constant 0 : i32
    return %c0_i32, %c0_i32_0 : i32, i32
  }
  func.func @transform_4(%arg0: i32) -> (i32, i32) {
    %c0_i32 = arith.constant 0 : i32
    %c0_i32_0 = arith.constant 0 : i32
    %c0_i32_1 = arith.constant 0 : i32
    return %c0_i32, %c0_i32_0 : i32, i32
  }
  func.func @transform_5(%arg0: i32) -> (i32, i32) {
    %c0_i32 = arith.constant 0 : i32
    %c0_i32_0 = arith.constant 0 : i32
    %c0_i32_1 = arith.constant 0 : i32
    return %c0_i32, %c0_i32_0 : i32, i32
  }
  func.func @transform_6(%arg0: i32) -> (i32, i32, i32) {
    %c0_i32 = arith.constant 0 : i32
    %c0_i32_0 = arith.constant 0 : i32
    %c0_i32_1 = arith.constant 0 : i32
    %c0_i32_2 = arith.constant 0 : i32
    return %c0_i32, %c0_i32_0, %c0_i32_1 : i32, i32, i32
  }
  func.func @transform_7(%arg0: i32) -> (i32, i32, i32) {
    %c0_i32 = arith.constant 0 : i32
    %c0_i32_0 = arith.constant 0 : i32
    %c0_i32_1 = arith.constant 0 : i32
    %c0_i32_2 = arith.constant 0 : i32
    return %c0_i32, %c0_i32_0, %c0_i32_1 : i32, i32, i32
  }
  func.func @transform_8(%arg0: i32) -> (i32, i32) {
    %c0_i32 = arith.constant 0 : i32
    %c0_i32_0 = arith.constant 0 : i32
    %c0_i32_1 = arith.constant 0 : i32
    return %c0_i32, %c0_i32_0 : i32, i32
  }
  func.func @transform_9(%arg0: i32) -> (i32, i32, i32) {
    %c0_i32 = arith.constant 0 : i32
    %c0_i32_0 = arith.constant 0 : i32
    %c0_i32_1 = arith.constant 0 : i32
    %c0_i32_2 = arith.constant 0 : i32
    return %c0_i32, %c0_i32_0, %c0_i32_1 : i32, i32, i32
  }
}

</mosaic_0001>

<llo_original>
// kernel: rotnet_forward.1
$region0: #{rotnet_forward.1}
  #allocation0 [shape = 'u32[]', space=smem, size = 0x4, offset = 0x4, fixed_abs, tag = 'smem constant byte address 0x4 - core index']
  #allocation1 [shape = 'u32[144,128]{1,0:T(1,128)}', space=vmem, size = 0x12000, scoped, tag = 'internal scratch']
  %s0 = inlined_call_operand.vmem [shape: f32[8,32], index: 0, kind: input, shape index: {}]
  %s1 = inlined_call_operand.vmem [shape: bf16[32,64], index: 1, kind: input, shape index: {}]
  %s2 = inlined_call_operand.vmem [shape: bf16[128,64], index: 2, kind: input, shape index: {}]
  %s3 = inlined_call_operand.vmem [shape: f32[3,64], index: 3, kind: input, shape index: {}]
  %s4 = inlined_call_operand.vmem [shape: bf16[64,36], index: 4, kind: input, shape index: {}]
  %s5 = inlined_call_operand.vmem [shape: f32[1,36], index: 5, kind: input, shape index: {}]
  %s6 = inlined_call_operand.vmem [shape: bf16[6,64,6], index: 6, kind: input, shape index: {}]
  %s7 = inlined_call_operand.vmem [shape: f32[6,1,6], index: 7, kind: input, shape index: {}]
  %s8 = inlined_call_operand.hbm [shape: f32[8,36], index: 8, kind: output, shape index: {0}]
  %s9 = inlined_call_operand.vmem [shape: f32[9,8,6], index: 9, kind: output, shape index: {1}]
  %10 = xla_tuple %s8, %s9
  %s11 = sld [smem:[#allocation0]]
  $region50: #{rotnet_forward.1} parent=0
    _
  %s13 = ssub.s32 1, %s11
  %s14 = scalar_select 0, %s13, %s11
  $region1: #{rotnet_forward.1} parent=0
    #allocation2 [shape = 'u8[4096]{0}', space=vmem, size = 0x1000, scoped, tag = 'output window, operand 0, single buffered']
    #allocation3 [shape = 's32[1]{0}', space=sflag, size = 0x4, scoped, tag = 'scoped memory for rotnet_forward.1']
    %15 = vsyncpa [#allocation3], 0
    // Predicated region
    $region2: #{rotnet_forward.1} parent=1 // pred_check
      _
    $region3: #{rotnet_forward.1} parent=1 // pred_check_branch
      %17 = sbr.rel (0) target = $region5
    $region4: #{rotnet_forward.1} parent=1 // pred_region
      _
    $region5: #{rotnet_forward.1} parent=1 // pred_fallthru
      _
    // Predicated region
    $region6: #{rotnet_forward.1} parent=1 // pred_check
      _
    $region7: #{rotnet_forward.1} parent=1 // pred_check_branch
      %19 = sbr.rel (0) target = $region9
    $region8: #{rotnet_forward.1} parent=1 // pred_region
      _
    $region9: #{rotnet_forward.1} parent=1 // pred_fallthru
      _
    // Predicated region
    $region10: #{rotnet_forward.1} parent=1 // pred_check
      _
    $region11: #{rotnet_forward.1} parent=1 // pred_check_branch
      %21 = sbr.rel (0) target = $region13
    $region12: #{rotnet_forward.1} parent=1 // pred_region
      _
    $region13: #{rotnet_forward.1} parent=1 // pred_fallthru
      _
    // Predicated region
    $region14: #{rotnet_forward.1} parent=1 // pred_check
      _
    $region15: #{rotnet_forward.1} parent=1 // pred_check_branch
      %23 = sbr.rel (0) target = $region17
    $region16: #{rotnet_forward.1} parent=1 // pred_region
      _
    $region17: #{rotnet_forward.1} parent=1 // pred_fallthru
      _
    // Predicated region
    $region18: #{rotnet_forward.1} parent=1 // pred_check
      _
    $region19: #{rotnet_forward.1} parent=1 // pred_check_branch
      %25 = sbr.rel (0) target = $region21
    $region20: #{rotnet_forward.1} parent=1 // pred_region
      _
    $region21: #{rotnet_forward.1} parent=1 // pred_fallthru
      _
    // Predicated region
    $region22: #{rotnet_forward.1} parent=1 // pred_check
      _
    $region23: #{rotnet_forward.1} parent=1 // pred_check_branch
      %27 = sbr.rel (0) target = $region25
    $region24: #{rotnet_forward.1} parent=1 // pred_region
      _
    $region25: #{rotnet_forward.1} parent=1 // pred_fallthru
      _
    // Predicated region
    $region26: #{rotnet_forward.1} parent=1 // pred_check
      _
    $region27: #{rotnet_forward.1} parent=1 // pred_check_branch
      %29 = sbr.rel (0) target = $region29
    $region28: #{rotnet_forward.1} parent=1 // pred_region
      _
    $region29: #{rotnet_forward.1} parent=1 // pred_fallthru
      _
    // Predicated region
    $region30: #{rotnet_forward.1} parent=1 // pred_check
      _
    $region31: #{rotnet_forward.1} parent=1 // pred_check_branch
      %31 = sbr.rel (0) target = $region33
    $region32: #{rotnet_forward.1} parent=1 // pred_region
      _
    $region33: #{rotnet_forward.1} parent=1 // pred_fallthru
      _
    %v33 = vld [vmem:[%s0] sm:$0xff]
    %v34 = vpack.c.bf16 %v33, %v33
    %v35 = vld [vmem:[%s1] sm:$0xf]
    %v36 = vld [vmem:[%s1 + $0x4] sm:$0xf]
    %v37 = vld [vmem:[%s1 + $0x8] sm:$0xf]
    %v38 = vld [vmem:[%s1 + $0xc] sm:$0xf]
    %v39 = vld [vmem:[%s3] sm:$0x1]
    %v40 = vlaneseq
    %v41 = vshrl.u32 %v40, 7
    %v42 = vsub.s32 0, %v41
    %v43 = vrot.slane %v39, %v42
    %v48 = vunpack.c.l.b16 %v35
    %v49 = vunpack.c.l.b16 %v36
    %v50 = vunpack.c.l.b16 %v37
    %v51 = vunpack.c.l.b16 %v38
    %v52 = vpack.c.b16 %v49, %v48
    %v53 = vpack.c.b16 %v51, %v50
    %vm56 = vcmask 261120
    %v58 = vsel %vm56, %v34, 0
    %60 = vmatprep.subr.bf16.mxu0 0
    %61 = vmatpush1.bf16.msra.mxu0 0
    %62 = vmatprep.subr.bf16.mxu0 0
    %63 = vmatpush1.bf16.msra.mxu0 0
    %64 = vmatprep.subr.bf16.mxu0 0
    %65 = vmatpush1.bf16.msra.mxu0 0
    %66 = vmatprep.subr.bf16.mxu0 0
    %67 = vmatpush1.bf16.msra.mxu0 0
    %68 = vmatprep.subr.bf16.mxu0 0
    %69 = vmatpush1.bf16.msra.mxu0 0
    %70 = vmatprep.subr.bf16.mxu0 0
    %71 = vmatpush1.bf16.msra.mxu0 0
    %72 = vmatprep.subr.bf16.mxu0 0
    %73 = vmatpush1.bf16.msra.mxu0 %v53
    %74 = vmatprep.subr.bf16.mxu0 0
    %75 = vmatpush1.bf16.msra.mxu0 %v52
    %76 = vmatprep.subr.bf16.mxu0 0
    %77 = vmatpush2.bf16.msra.mxu0 0
    %78 = vmatprep.subr.bf16.mxu0 0
    %79 = vmatpush2.bf16.msra.mxu0 0
    %80 = vmatprep.subr.bf16.mxu0 0
    %81 = vmatpush2.bf16.msra.mxu0 0
    %82 = vmatprep.subr.bf16.mxu0 0
    %83 = vmatpush2.bf16.msra.mxu0 0
    %84 = vmatprep.subr.bf16.mxu0 0
    %85 = vmatpush2.bf16.msra.mxu0 0
    %86 = vmatprep.subr.bf16.mxu0 0
    %87 = vmatpush2.bf16.msra.mxu0 0
    %88 = vmatprep.subr.bf16.mxu0 0
    %89 = vmatpush2.bf16.msra.mxu0 0
    %90 = vmatprep.subr.bf16.mxu0 0
    %91 = vmatpush2.bf16.msra.mxu0 0
    %92 = vmatprep.mubr.bf16.mxu0 0
    %93 = vmatmul.mubr.bf16.gmra.mxu0 %v58
    %v94 = vpop.f32.mrf.mxu0
    %v95 = vadd.f32 %v43, %v94
    %v96 = vpop.f32.mrf.mxu0
    %v97 = vpop.f32.mrf.mxu0
    %v98 = vpop.f32.mrf.mxu0
    %99 = vdwg.mxu0
    %v100 = vmax.f32 %v95, 0.0
    %v101 = vpack.c.bf16 %v100, %v100
    %v102 = vld [vmem:[%s2] sm:$0xf]
    %v103 = vld [vmem:[%s2 + $0x4] sm:$0xf]
    %v104 = vld [vmem:[%s2 + $0x8] sm:$0xf]
    %v105 = vld [vmem:[%s2 + $0xc] sm:$0xf]
    %v106 = vld [vmem:[%s2 + $0x10] sm:$0xf]
    %v107 = vld [vmem:[%s2 + $0x14] sm:$0xf]
    %v108 = vld [vmem:[%s2 + $0x18] sm:$0xf]
    %v109 = vld [vmem:[%s2 + $0x1c] sm:$0xf]
    %v110 = vld [vmem:[%s3 + $0x1] sm:$0x1]
    %v111 = vlaneseq
    %v112 = vshrl.u32 %v111, 7
    %v113 = vsub.s32 0, %v112
    %v114 = vrot.slane %v110, %v113
    %v123 = vunpack.c.l.b16 %v102
    %v124 = vunpack.c.l.b16 %v103
    %v125 = vunpack.c.l.b16 %v104
    %v126 = vunpack.c.l.b16 %v105
    %v127 = vunpack.c.l.b16 %v106
    %v128 = vunpack.c.l.b16 %v107
    %v129 = vunpack.c.l.b16 %v108
    %v130 = vunpack.c.l.b16 %v109
    %v131 = vpack.c.b16 %v124, %v123
    %v132 = vpack.c.b16 %v126, %v125
    %v133 = vpack.c.b16 %v128, %v127
    %v134 = vpack.c.b16 %v130, %v129
    %vm139 = vcmask 523264
    %v141 = vsel %vm139, %v101, 0
    %143 = vmatprep.subr.bf16.mxu0 0
    %144 = vmatpush1.bf16.msra.mxu0 0
    %145 = vmatprep.subr.bf16.mxu0 0
    %146 = vmatpush1.bf16.msra.mxu0 0
    %147 = vmatprep.subr.bf16.mxu0 0
    %148 = vmatpush1.bf16.msra.mxu0 0
    %149 = vmatprep.subr.bf16.mxu0 0
    %150 = vmatpush1.bf16.msra.mxu0 0
    %151 = vmatprep.subr.bf16.mxu0 0
    %152 = vmatpush1.bf16.msra.mxu0 %v134
    %153 = vmatprep.subr.bf16.mxu0 0
    %154 = vmatpush1.bf16.msra.mxu0 %v133
    %155 = vmatprep.subr.bf16.mxu0 0
    %156 = vmatpush1.bf16.msra.mxu0 %v132
    %157 = vmatprep.subr.bf16.mxu0 0
    %158 = vmatpush1.bf16.msra.mxu0 %v131
    %159 = vmatprep.subr.bf16.mxu0 0
    %160 = vmatpush2.bf16.msra.mxu0 0
    %161 = vmatprep.subr.bf16.mxu0 0
    %162 = vmatpush2.bf16.msra.mxu0 0
    %163 = vmatprep.subr.bf16.mxu0 0
    %164 = vmatpush2.bf16.msra.mxu0 0
    %165 = vmatprep.subr.bf16.mxu0 0
    %166 = vmatpush2.bf16.msra.mxu0 0
    %167 = vmatprep.subr.bf16.mxu0 0
    %168 = vmatpush2.bf16.msra.mxu0 0
    %169 = vmatprep.subr.bf16.mxu0 0
    %170 = vmatpush2.bf16.msra.mxu0 0
    %171 = vmatprep.subr.bf16.mxu0 0
    %172 = vmatpush2.bf16.msra.mxu0 0
    %173 = vmatprep.subr.bf16.mxu0 0
    %174 = vmatpush2.bf16.msra.mxu0 0
    %175 = vmatprep.mubr.bf16.mxu0 0
    %176 = vmatmul.mubr.bf16.gmra.mxu0 %v141
    %v177 = vpop.f32.mrf.mxu0
    %v178 = vadd.f32 %v114, %v177
    %v179 = vpop.f32.mrf.mxu0
    %v180 = vpop.f32.mrf.mxu0
    %v181 = vpop.f32.mrf.mxu0
    %182 = vdwg.mxu0
    %v183 = vmax.f32 %v178, 0.0
    %v184 = vpack.c.bf16 %v183, %v183
    %v185 = vld [vmem:[%s2 + $0x20] sm:$0xf]
    %v186 = vld [vmem:[%s2 + $0x24] sm:$0xf]
    %v187 = vld [vmem:[%s2 + $0x28] sm:$0xf]
    %v188 = vld [vmem:[%s2 + $0x2c] sm:$0xf]
    %v189 = vld [vmem:[%s2 + $0x30] sm:$0xf]
    %v190 = vld [vmem:[%s2 + $0x34] sm:$0xf]
    %v191 = vld [vmem:[%s2 + $0x38] sm:$0xf]
    %v192 = vld [vmem:[%s2 + $0x3c] sm:$0xf]
    %v193 = vld [vmem:[%s3 + $0x2] sm:$0x1]
    %v194 = vlaneseq
    %v195 = vshrl.u32 %v194, 7
    %v196 = vsub.s32 0, %v195
    %v197 = vrot.slane %v193, %v196
    %v206 = vunpack.c.l.b16 %v185
    %v207 = vunpack.c.l.b16 %v186
    %v208 = vunpack.c.l.b16 %v187
    %v209 = vunpack.c.l.b16 %v188
    %v210 = vunpack.c.l.b16 %v189
    %v211 = vunpack.c.l.b16 %v190
    %v212 = vunpack.c.l.b16 %v191
    %v213 = vunpack.c.l.b16 %v192
    %v214 = vpack.c.b16 %v207, %v206
    %v215 = vpack.c.b16 %v209, %v208
    %v216 = vpack.c.b16 %v211, %v210
    %v217 = vpack.c.b16 %v213, %v212
    %v223 = vsel %vm139, %v184, 0
    %225 = vmatprep.subr.bf16.mxu0 0
    %226 = vmatpush1.bf16.msra.mxu0 0
    %227 = vmatprep.subr.bf16.mxu0 0
    %228 = vmatpush1.bf16.msra.mxu0 0
    %229 = vmatprep.subr.bf16.mxu0 0
    %230 = vmatpush1.bf16.msra.mxu0 0
    %231 = vmatprep.subr.bf16.mxu0 0
    %232 = vmatpush1.bf16.msra.mxu0 0
    %233 = vmatprep.subr.bf16.mxu0 0
    %234 = vmatpush1.bf16.msra.mxu0 %v217
    %235 = vmatprep.subr.bf16.mxu0 0
    %236 = vmatpush1.bf16.msra.mxu0 %v216
    %237 = vmatprep.subr.bf16.mxu0 0
    %238 = vmatpush1.bf16.msra.mxu0 %v215
    %239 = vmatprep.subr.bf16.mxu0 0
    %240 = vmatpush1.bf16.msra.mxu0 %v214
    %241 = vmatprep.subr.bf16.mxu0 0
    %242 = vmatpush2.bf16.msra.mxu0 0
    %243 = vmatprep.subr.bf16.mxu0 0
    %244 = vmatpush2.bf16.msra.mxu0 0
    %245 = vmatprep.subr.bf16.mxu0 0
    %246 = vmatpush2.bf16.msra.mxu0 0
    %247 = vmatprep.subr.bf16.mxu0 0
    %248 = vmatpush2.bf16.msra.mxu0 0
    %249 = vmatprep.subr.bf16.mxu0 0
    %250 = vmatpush2.bf16.msra.mxu0 0
    %251 = vmatprep.subr.bf16.mxu0 0
    %252 = vmatpush2.bf16.msra.mxu0 0
    %253 = vmatprep.subr.bf16.mxu0 0
    %254 = vmatpush2.bf16.msra.mxu0 0
    %255 = vmatprep.subr.bf16.mxu0 0
    %256 = vmatpush2.bf16.msra.mxu0 0
    %257 = vmatprep.mubr.bf16.mxu0 0
    %258 = vmatmul.mubr.bf16.gmra.mxu0 %v223
    %v259 = vpop.f32.mrf.mxu0
    %v260 = vadd.f32 %v197, %v259
    %v261 = vpop.f32.mrf.mxu0
    %v262 = vpop.f32.mrf.mxu0
    %v263 = vpop.f32.mrf.mxu0
    %264 = vdwg.mxu0
    %v265 = vmax.f32 %v260, 0.0
    %v266 = vpack.c.bf16 %v265, %v265
    %v267 = vld [vmem:[%s4] sm:$0xf]
    %v268 = vld [vmem:[%s4 + $0x4] sm:$0xf]
    %v269 = vld [vmem:[%s4 + $0x8] sm:$0xf]
    %v270 = vld [vmem:[%s4 + $0xc] sm:$0xf]
    %v271 = vld [vmem:[%s4 + $0x10] sm:$0xf]
    %v272 = vld [vmem:[%s4 + $0x14] sm:$0xf]
    %v273 = vld [vmem:[%s4 + $0x18] sm:$0xf]
    %v274 = vld [vmem:[%s4 + $0x1c] sm:$0xf]
    %v275 = vld [vmem:[%s5] sm:$0x1]
    %v277 = vlaneseq
    %v278 = vshrl.u32 %v277, 7
    %v279 = vsub.s32 0, %v278
    %v280 = vrot.slane %v275, %v279
    %v290 = vunpack.c.l.b16 %v267
    %v291 = vunpack.c.l.b16 %v268
    %v292 = vunpack.c.l.b16 %v269
    %v293 = vunpack.c.l.b16 %v270
    %v294 = vunpack.c.l.b16 %v271
    %v295 = vunpack.c.l.b16 %v272
    %v296 = vunpack.c.l.b16 %v273
    %v297 = vunpack.c.l.b16 %v274
    %v298 = vpack.c.b16 %v291, %v290
    %v299 = vpack.c.b16 %v293, %v292
    %v300 = vpack.c.b16 %v295, %v294
    %v301 = vpack.c.b16 %v297, %v296
    %v307 = vsel %vm139, %v266, 0
    %309 = vmatprep.subr.bf16.mxu0 0
    %310 = vmatpush1.bf16.msra.mxu0 0
    %311 = vmatprep.subr.bf16.mxu0 0
    %312 = vmatpush1.bf16.msra.mxu0 0
    %313 = vmatprep.subr.bf16.mxu0 0
    %314 = vmatpush1.bf16.msra.mxu0 0
    %315 = vmatprep.subr.bf16.mxu0 0
    %316 = vmatpush1.bf16.msra.mxu0 0
    %317 = vmatprep.subr.bf16.mxu0 0
    %318 = vmatpush1.bf16.msra.mxu0 %v301
    %319 = vmatprep.subr.bf16.mxu0 0
    %320 = vmatpush1.bf16.msra.mxu0 %v300
    %321 = vmatprep.subr.bf16.mxu0 0
    %322 = vmatpush1.bf16.msra.mxu0 %v299
    %323 = vmatprep.subr.bf16.mxu0 0
    %324 = vmatpush1.bf16.msra.mxu0 %v298
    %325 = vmatprep.subr.bf16.mxu0 0
    %326 = vmatpush2.bf16.msra.mxu0 0
    %327 = vmatprep.subr.bf16.mxu0 0
    %328 = vmatpush2.bf16.msra.mxu0 0
    %329 = vmatprep.subr.bf16.mxu0 0
    %330 = vmatpush2.bf16.msra.mxu0 0
    %331 = vmatprep.subr.bf16.mxu0 0
    %332 = vmatpush2.bf16.msra.mxu0 0
    %333 = vmatprep.subr.bf16.mxu0 0
    %334 = vmatpush2.bf16.msra.mxu0 0
    %335 = vmatprep.subr.bf16.mxu0 0
    %336 = vmatpush2.bf16.msra.mxu0 0
    %337 = vmatprep.subr.bf16.mxu0 0
    %338 = vmatpush2.bf16.msra.mxu0 0
    %339 = vmatprep.subr.bf16.mxu0 0
    %340 = vmatpush2.bf16.msra.mxu0 0
    %341 = vmatprep.mubr.bf16.mxu0 0
    %342 = vmatmul.mubr.bf16.gmra.mxu0 %v307
    %v343 = vpop.f32.mrf.mxu0
    %v344 = vadd.f32 %v280, %v343
    %v345 = vpop.f32.mrf.mxu0
    %v346 = vpop.f32.mrf.mxu0
    %v347 = vpop.f32.mrf.mxu0
    %348 = vdwg.mxu0
    %vm349 = vcmask 293888
    %350 = vst.msk [vmem:[#allocation2] sm:$0xff] %vm349, %v344
    %v351 = vld [vmem:[%s6] sm:$0xf]
    %v352 = vld [vmem:[%s6 + $0x4] sm:$0xf]
    %v353 = vld [vmem:[%s6 + $0x8] sm:$0xf]
    %v354 = vld [vmem:[%s6 + $0xc] sm:$0xf]
    %v355 = vld [vmem:[%s6 + $0x10] sm:$0xf]
    %v356 = vld [vmem:[%s6 + $0x14] sm:$0xf]
    %v357 = vld [vmem:[%s6 + $0x18] sm:$0xf]
    %v358 = vld [vmem:[%s6 + $0x1c] sm:$0xf]
    %v359 = vld [vmem:[%s7] sm:$0x1]
    %v361 = vlaneseq
    %v362 = vshrl.u32 %v361, 7
    %v363 = vsub.s32 0, %v362
    %v364 = vrot.slane %v359, %v363
    %v374 = vunpack.c.l.b16 %v351
    %v375 = vunpack.c.l.b16 %v352
    %v376 = vunpack.c.l.b16 %v353
    %v377 = vunpack.c.l.b16 %v354
    %v378 = vunpack.c.l.b16 %v355
    %v379 = vunpack.c.l.b16 %v356
    %v380 = vunpack.c.l.b16 %v357
    %v381 = vunpack.c.l.b16 %v358
    %v382 = vpack.c.b16 %v375, %v374
    %v383 = vpack.c.b16 %v377, %v376
    %v384 = vpack.c.b16 %v379, %v378
    %v385 = vpack.c.b16 %v381, %v380
    %390 = vmatprep.subr.bf16.mxu0 0
    %391 = vmatpush1.bf16.msra.mxu0 0
    %392 = vmatprep.subr.bf16.mxu0 0
    %393 = vmatpush1.bf16.msra.mxu0 0
    %394 = vmatprep.subr.bf16.mxu0 0
    %395 = vmatpush1.bf16.msra.mxu0 0
    %396 = vmatprep.subr.bf16.mxu0 0
    %397 = vmatpush1.bf16.msra.mxu0 0
    %398 = vmatprep.subr.bf16.mxu0 0
    %399 = vmatpush1.bf16.msra.mxu0 %v385
    %400 = vmatprep.subr.bf16.mxu0 0
    %401 = vmatpush1.bf16.msra.mxu0 %v384
    %402 = vmatprep.subr.bf16.mxu0 0
    %403 = vmatpush1.bf16.msra.mxu0 %v383
    %404 = vmatprep.subr.bf16.mxu0 0
    %405 = vmatpush1.bf16.msra.mxu0 %v382
    %406 = vmatprep.subr.bf16.mxu0 0
    %407 = vmatpush2.bf16.msra.mxu0 0
    %408 = vmatprep.subr.bf16.mxu0 0
    %409 = vmatpush2.bf16.msra.mxu0 0
    %410 = vmatprep.subr.bf16.mxu0 0
    %411 = vmatpush2.bf16.msra.mxu0 0
    %412 = vmatprep.subr.bf16.mxu0 0
    %413 = vmatpush2.bf16.msra.mxu0 0
    %414 = vmatprep.subr.bf16.mxu0 0
    %415 = vmatpush2.bf16.msra.mxu0 0
    %416 = vmatprep.subr.bf16.mxu0 0
    %417 = vmatpush2.bf16.msra.mxu0 0
    %418 = vmatprep.subr.bf16.mxu0 0
    %419 = vmatpush2.bf16.msra.mxu0 0
    %420 = vmatprep.subr.bf16.mxu0 0
    %421 = vmatpush2.bf16.msra.mxu0 0
    %422 = vmatprep.mubr.bf16.mxu0 0
    %423 = vmatmul.mubr.bf16.gmra.mxu0 %v307
    %v424 = vpop.f32.mrf.mxu0
    %v425 = vadd.f32 %v364, %v424
    %v426 = vpop.f32.mrf.mxu0
    %v427 = vpop.f32.mrf.mxu0
    %v428 = vpop.f32.mrf.mxu0
    %429 = vdwg.mxu0
    %s430 = scalar_lea.vmem %s6, 32
    %v431 = vld [vmem:[%s430] sm:$0xf]
    %v432 = vld [vmem:[%s430 + $0x4] sm:$0xf]
    %v433 = vld [vmem:[%s430 + $0x8] sm:$0xf]
    %v434 = vld [vmem:[%s430 + $0xc] sm:$0xf]
    %v435 = vld [vmem:[%s430 + $0x10] sm:$0xf]
    %v436 = vld [vmem:[%s430 + $0x14] sm:$0xf]
    %v437 = vld [vmem:[%s430 + $0x18] sm:$0xf]
    %v438 = vld [vmem:[%s430 + $0x1c] sm:$0xf]
    %s439 = scalar_lea.vmem %s7, 1
    %v440 = vld [vmem:[%s439] sm:$0x1]
    %v442 = vlaneseq
    %v443 = vshrl.u32 %v442, 7
    %v444 = vsub.s32 0, %v443
    %v445 = vrot.slane %v440, %v444
    %v455 = vunpack.c.l.b16 %v431
    %v456 = vunpack.c.l.b16 %v432
    %v457 = vunpack.c.l.b16 %v433
    %v458 = vunpack.c.l.b16 %v434
    %v459 = vunpack.c.l.b16 %v435
    %v460 = vunpack.c.l.b16 %v436
    %v461 = vunpack.c.l.b16 %v437
    %v462 = vunpack.c.l.b16 %v438
    %v463 = vpack.c.b16 %v456, %v455
    %v464 = vpack.c.b16 %v458, %v457
    %v465 = vpack.c.b16 %v460, %v459
    %v466 = vpack.c.b16 %v462, %v461
    %471 = vmatprep.subr.bf16.mxu0 0
    %472 = vmatpush1.bf16.msra.mxu0 0
    %473 = vmatprep.subr.bf16.mxu0 0
    %474 = vmatpush1.bf16.msra.mxu0 0
    %475 = vmatprep.subr.bf16.mxu0 0
    %476 = vmatpush1.bf16.msra.mxu0 0
    %477 = vmatprep.subr.bf16.mxu0 0
    %478 = vmatpush1.bf16.msra.mxu0 0
    %479 = vmatprep.subr.bf16.mxu0 0
    %480 = vmatpush1.bf16.msra.mxu0 %v466
    %481 = vmatprep.subr.bf16.mxu0 0
    %482 = vmatpush1.bf16.msra.mxu0 %v465
    %483 = vmatprep.subr.bf16.mxu0 0
    %484 = vmatpush1.bf16.msra.mxu0 %v464
    %485 = vmatprep.subr.bf16.mxu0 0
    %486 = vmatpush1.bf16.msra.mxu0 %v463
    %487 = vmatprep.subr.bf16.mxu0 0
    %488 = vmatpush2.bf16.msra.mxu0 0
    %489 = vmatprep.subr.bf16.mxu0 0
    %490 = vmatpush2.bf16.msra.mxu0 0
    %491 = vmatprep.subr.bf16.mxu0 0
    %492 = vmatpush2.bf16.msra.mxu0 0
    %493 = vmatprep.subr.bf16.mxu0 0
    %494 = vmatpush2.bf16.msra.mxu0 0
    %495 = vmatprep.subr.bf16.mxu0 0
    %496 = vmatpush2.bf16.msra.mxu0 0
    %497 = vmatprep.subr.bf16.mxu0 0
    %498 = vmatpush2.bf16.msra.mxu0 0
    %499 = vmatprep.subr.bf16.mxu0 0
    %500 = vmatpush2.bf16.msra.mxu0 0
    %501 = vmatprep.subr.bf16.mxu0 0
    %502 = vmatpush2.bf16.msra.mxu0 0
    %503 = vmatprep.mubr.bf16.mxu0 0
    %504 = vmatmul.mubr.bf16.gmra.mxu0 %v307
    %v505 = vpop.f32.mrf.mxu0
    %v506 = vadd.f32 %v445, %v505
    %v507 = vpop.f32.mrf.mxu0
    %v508 = vpop.f32.mrf.mxu0
    %v509 = vpop.f32.mrf.mxu0
    %510 = vdwg.mxu0
    %s511 = scalar_lea.vmem %s6, 64
    %v512 = vld [vmem:[%s511] sm:$0xf]
    %v513 = vld [vmem:[%s511 + $0x4] sm:$0xf]
    %v514 = vld [vmem:[%s511 + $0x8] sm:$0xf]
    %v515 = vld [vmem:[%s511 + $0xc] sm:$0xf]
    %v516 = vld [vmem:[%s511 + $0x10] sm:$0xf]
    %v517 = vld [vmem:[%s511 + $0x14] sm:$0xf]
    %v518 = vld [vmem:[%s511 + $0x18] sm:$0xf]
    %v519 = vld [vmem:[%s511 + $0x1c] sm:$0xf]
    %s520 = scalar_lea.vmem %s7, 2
    %v521 = vld [vmem:[%s520] sm:$0x1]
    %v523 = vlaneseq
    %v524 = vshrl.u32 %v523, 7
    %v525 = vsub.s32 0, %v524
    %v526 = vrot.slane %v521, %v525
    %v536 = vunpack.c.l.b16 %v512
    %v537 = vunpack.c.l.b16 %v513
    %v538 = vunpack.c.l.b16 %v514
    %v539 = vunpack.c.l.b16 %v515
    %v540 = vunpack.c.l.b16 %v516
    %v541 = vunpack.c.l.b16 %v517
    %v542 = vunpack.c.l.b16 %v518
    %v543 = vunpack.c.l.b16 %v519
    %v544 = vpack.c.b16 %v537, %v536
    %v545 = vpack.c.b16 %v539, %v538
    %v546 = vpack.c.b16 %v541, %v540
    %v547 = vpack.c.b16 %v543, %v542
    %552 = vmatprep.subr.bf16.mxu0 0
    %553 = vmatpush1.bf16.msra.mxu0 0
    %554 = vmatprep.subr.bf16.mxu0 0
    %555 = vmatpush1.bf16.msra.mxu0 0
    %556 = vmatprep.subr.bf16.mxu0 0
    %557 = vmatpush1.bf16.msra.mxu0 0
    %558 = vmatprep.subr.bf16.mxu0 0
    %559 = vmatpush1.bf16.msra.mxu0 0
    %560 = vmatprep.subr.bf16.mxu0 0
    %561 = vmatpush1.bf16.msra.mxu0 %v547
    %562 = vmatprep.subr.bf16.mxu0 0
    %563 = vmatpush1.bf16.msra.mxu0 %v546
    %564 = vmatprep.subr.bf16.mxu0 0
    %565 = vmatpush1.bf16.msra.mxu0 %v545
    %566 = vmatprep.subr.bf16.mxu0 0
    %567 = vmatpush1.bf16.msra.mxu0 %v544
    %568 = vmatprep.subr.bf16.mxu0 0
    %569 = vmatpush2.bf16.msra.mxu0 0
    %570 = vmatprep.subr.bf16.mxu0 0
    %571 = vmatpush2.bf16.msra.mxu0 0
    %572 = vmatprep.subr.bf16.mxu0 0
    %573 = vmatpush2.bf16.msra.mxu0 0
    %574 = vmatprep.subr.bf16.mxu0 0
    %575 = vmatpush2.bf16.msra.mxu0 0
    %576 = vmatprep.subr.bf16.mxu0 0
    %577 = vmatpush2.bf16.msra.mxu0 0
    %578 = vmatprep.subr.bf16.mxu0 0
    %579 = vmatpush2.bf16.msra.mxu0 0
    %580 = vmatprep.subr.bf16.mxu0 0
    %581 = vmatpush2.bf16.msra.mxu0 0
    %582 = vmatprep.subr.bf16.mxu0 0
    %583 = vmatpush2.bf16.msra.mxu0 0
    %584 = vmatprep.mubr.bf16.mxu0 0
    %585 = vmatmul.mubr.bf16.gmra.mxu0 %v307
    %v586 = vpop.f32.mrf.mxu0
    %v587 = vadd.f32 %v526, %v586
    %v588 = vpop.f32.mrf.mxu0
    %v589 = vpop.f32.mrf.mxu0
    %v590 = vpop.f32.mrf.mxu0
    %591 = vdwg.mxu0
    %s592 = scalar_lea.vmem %s6, 96
    %v593 = vld [vmem:[%s592] sm:$0xf]
    %v594 = vld [vmem:[%s592 + $0x4] sm:$0xf]
    %v595 = vld [vmem:[%s592 + $0x8] sm:$0xf]
    %v596 = vld [vmem:[%s592 + $0xc] sm:$0xf]
    %v597 = vld [vmem:[%s592 + $0x10] sm:$0xf]
    %v598 = vld [vmem:[%s592 + $0x14] sm:$0xf]
    %v599 = vld [vmem:[%s592 + $0x18] sm:$0xf]
    %v600 = vld [vmem:[%s592 + $0x1c] sm:$0xf]
    %s601 = scalar_lea.vmem %s7, 3
    %v602 = vld [vmem:[%s601] sm:$0x1]
    %v604 = vlaneseq
    %v605 = vshrl.u32 %v604, 7
    %v606 = vsub.s32 0, %v605
    %v607 = vrot.slane %v602, %v606
    %v617 = vunpack.c.l.b16 %v593
    %v618 = vunpack.c.l.b16 %v594
    %v619 = vunpack.c.l.b16 %v595
    %v620 = vunpack.c.l.b16 %v596
    %v621 = vunpack.c.l.b16 %v597
    %v622 = vunpack.c.l.b16 %v598
    %v623 = vunpack.c.l.b16 %v599
    %v624 = vunpack.c.l.b16 %v600
    %v625 = vpack.c.b16 %v618, %v617
    %v626 = vpack.c.b16 %v620, %v619
    %v627 = vpack.c.b16 %v622, %v621
    %v628 = vpack.c.b16 %v624, %v623
    %633 = vmatprep.subr.bf16.mxu0 0
    %634 = vmatpush1.bf16.msra.mxu0 0
    %635 = vmatprep.subr.bf16.mxu0 0
    %636 = vmatpush1.bf16.msra.mxu0 0
    %637 = vmatprep.subr.bf16.mxu0 0
    %638 = vmatpush1.bf16.msra.mxu0 0
    %639 = vmatprep.subr.bf16.mxu0 0
    %640 = vmatpush1.bf16.msra.mxu0 0
    %641 = vmatprep.subr.bf16.mxu0 0
    %642 = vmatpush1.bf16.msra.mxu0 %v628
    %643 = vmatprep.subr.bf16.mxu0 0
    %644 = vmatpush1.bf16.msra.mxu0 %v627
    %645 = vmatprep.subr.bf16.mxu0 0
    %646 = vmatpush1.bf16.msra.mxu0 %v626
    %647 = vmatprep.subr.bf16.mxu0 0
    %648 = vmatpush1.bf16.msra.mxu0 %v625
    %649 = vmatprep.subr.bf16.mxu0 0
    %650 = vmatpush2.bf16.msra.mxu0 0
    %651 = vmatprep.subr.bf16.mxu0 0
    %652 = vmatpush2.bf16.msra.mxu0 0
    %653 = vmatprep.subr.bf16.mxu0 0
    %654 = vmatpush2.bf16.msra.mxu0 0
    %655 = vmatprep.subr.bf16.mxu0 0
    %656 = vmatpush2.bf16.msra.mxu0 0
    %657 = vmatprep.subr.bf16.mxu0 0
    %658 = vmatpush2.bf16.msra.mxu0 0
    %659 = vmatprep.subr.bf16.mxu0 0
    %660 = vmatpush2.bf16.msra.mxu0 0
    %661 = vmatprep.subr.bf16.mxu0 0
    %662 = vmatpush2.bf16.msra.mxu0 0
    %663 = vmatprep.subr.bf16.mxu0 0
    %664 = vmatpush2.bf16.msra.mxu0 0
    %665 = vmatprep.mubr.bf16.mxu0 0
    %666 = vmatmul.mubr.bf16.gmra.mxu0 %v307
    %v667 = vpop.f32.mrf.mxu0
    %v668 = vadd.f32 %v607, %v667
    %v669 = vpop.f32.mrf.mxu0
    %v670 = vpop.f32.mrf.mxu0
    %v671 = vpop.f32.mrf.mxu0
    %672 = vdwg.mxu0
    %s673 = scalar_lea.vmem %s6, 128
    %v674 = vld [vmem:[%s673] sm:$0xf]
    %v675 = vld [vmem:[%s673 + $0x4] sm:$0xf]
    %v676 = vld [vmem:[%s673 + $0x8] sm:$0xf]
    %v677 = vld [vmem:[%s673 + $0xc] sm:$0xf]
    %v678 = vld [vmem:[%s673 + $0x10] sm:$0xf]
    %v679 = vld [vmem:[%s673 + $0x14] sm:$0xf]
    %v680 = vld [vmem:[%s673 + $0x18] sm:$0xf]
    %v681 = vld [vmem:[%s673 + $0x1c] sm:$0xf]
    %s682 = scalar_lea.vmem %s7, 4
    %v683 = vld [vmem:[%s682] sm:$0x1]
    %v685 = vlaneseq
    %v686 = vshrl.u32 %v685, 7
    %v687 = vsub.s32 0, %v686
    %v688 = vrot.slane %v683, %v687
    %v698 = vunpack.c.l.b16 %v674
    %v699 = vunpack.c.l.b16 %v675
    %v700 = vunpack.c.l.b16 %v676
    %v701 = vunpack.c.l.b16 %v677
    %v702 = vunpack.c.l.b16 %v678
    %v703 = vunpack.c.l.b16 %v679
    %v704 = vunpack.c.l.b16 %v680
    %v705 = vunpack.c.l.b16 %v681
    %v706 = vpack.c.b16 %v699, %v698
    %v707 = vpack.c.b16 %v701, %v700
    %v708 = vpack.c.b16 %v703, %v702
    %v709 = vpack.c.b16 %v705, %v704
    %714 = vmatprep.subr.bf16.mxu0 0
    %715 = vmatpush1.bf16.msra.mxu0 0
    %716 = vmatprep.subr.bf16.mxu0 0
    %717 = vmatpush1.bf16.msra.mxu0 0
    %718 = vmatprep.subr.bf16.mxu0 0
    %719 = vmatpush1.bf16.msra.mxu0 0
    %720 = vmatprep.subr.bf16.mxu0 0
    %721 = vmatpush1.bf16.msra.mxu0 0
    %722 = vmatprep.subr.bf16.mxu0 0
    %723 = vmatpush1.bf16.msra.mxu0 %v709
    %724 = vmatprep.subr.bf16.mxu0 0
    %725 = vmatpush1.bf16.msra.mxu0 %v708
    %726 = vmatprep.subr.bf16.mxu0 0
    %727 = vmatpush1.bf16.msra.mxu0 %v707
    %728 = vmatprep.subr.bf16.mxu0 0
    %729 = vmatpush1.bf16.msra.mxu0 %v706
    %730 = vmatprep.subr.bf16.mxu0 0
    %731 = vmatpush2.bf16.msra.mxu0 0
    %732 = vmatprep.subr.bf16.mxu0 0
    %733 = vmatpush2.bf16.msra.mxu0 0
    %734 = vmatprep.subr.bf16.mxu0 0
    %735 = vmatpush2.bf16.msra.mxu0 0
    %736 = vmatprep.subr.bf16.mxu0 0
    %737 = vmatpush2.bf16.msra.mxu0 0
    %738 = vmatprep.subr.bf16.mxu0 0
    %739 = vmatpush2.bf16.msra.mxu0 0
    %740 = vmatprep.subr.bf16.mxu0 0
    %741 = vmatpush2.bf16.msra.mxu0 0
    %742 = vmatprep.subr.bf16.mxu0 0
    %743 = vmatpush2.bf16.msra.mxu0 0
    %744 = vmatprep.subr.bf16.mxu0 0
    %745 = vmatpush2.bf16.msra.mxu0 0
    %746 = vmatprep.mubr.bf16.mxu0 0
    %747 = vmatmul.mubr.bf16.gmra.mxu0 %v307
    %v748 = vpop.f32.mrf.mxu0
    %v749 = vadd.f32 %v688, %v748
    %v750 = vpop.f32.mrf.mxu0
    %v751 = vpop.f32.mrf.mxu0
    %v752 = vpop.f32.mrf.mxu0
    %753 = vdwg.mxu0
    %s754 = scalar_lea.vmem %s6, 160
    %v755 = vld [vmem:[%s754] sm:$0xf]
    %v756 = vld [vmem:[%s754 + $0x4] sm:$0xf]
    %v757 = vld [vmem:[%s754 + $0x8] sm:$0xf]
    %v758 = vld [vmem:[%s754 + $0xc] sm:$0xf]
    %v759 = vld [vmem:[%s754 + $0x10] sm:$0xf]
    %v760 = vld [vmem:[%s754 + $0x14] sm:$0xf]
    %v761 = vld [vmem:[%s754 + $0x18] sm:$0xf]
    %v762 = vld [vmem:[%s754 + $0x1c] sm:$0xf]
    %s763 = scalar_lea.vmem %s7, 5
    %v764 = vld [vmem:[%s763] sm:$0x1]
    %v766 = vlaneseq
    %v767 = vshrl.u32 %v766, 7
    %v768 = vsub.s32 0, %v767
    %v769 = vrot.slane %v764, %v768
    %v779 = vunpack.c.l.b16 %v755
    %v780 = vunpack.c.l.b16 %v756
    %v781 = vunpack.c.l.b16 %v757
    %v782 = vunpack.c.l.b16 %v758
    %v783 = vunpack.c.l.b16 %v759
    %v784 = vunpack.c.l.b16 %v760
    %v785 = vunpack.c.l.b16 %v761
    %v786 = vunpack.c.l.b16 %v762
    %v787 = vpack.c.b16 %v780, %v779
    %v788 = vpack.c.b16 %v782, %v781
    %v789 = vpack.c.b16 %v784, %v783
    %v790 = vpack.c.b16 %v786, %v785
    %795 = vmatprep.subr.bf16.mxu0 0
    %796 = vmatpush1.bf16.msra.mxu0 0
    %797 = vmatprep.subr.bf16.mxu0 0
    %798 = vmatpush1.bf16.msra.mxu0 0
    %799 = vmatprep.subr.bf16.mxu0 0
    %800 = vmatpush1.bf16.msra.mxu0 0
    %801 = vmatprep.subr.bf16.mxu0 0
    %802 = vmatpush1.bf16.msra.mxu0 0
    %803 = vmatprep.subr.bf16.mxu0 0
    %804 = vmatpush1.bf16.msra.mxu0 %v790
    %805 = vmatprep.subr.bf16.mxu0 0
    %806 = vmatpush1.bf16.msra.mxu0 %v789
    %807 = vmatprep.subr.bf16.mxu0 0
    %808 = vmatpush1.bf16.msra.mxu0 %v788
    %809 = vmatprep.subr.bf16.mxu0 0
    %810 = vmatpush1.bf16.msra.mxu0 %v787
    %811 = vmatprep.subr.bf16.mxu0 0
    %812 = vmatpush2.bf16.msra.mxu0 0
    %813 = vmatprep.subr.bf16.mxu0 0
    %814 = vmatpush2.bf16.msra.mxu0 0
    %815 = vmatprep.subr.bf16.mxu0 0
    %816 = vmatpush2.bf16.msra.mxu0 0
    %817 = vmatprep.subr.bf16.mxu0 0
    %818 = vmatpush2.bf16.msra.mxu0 0
    %819 = vmatprep.subr.bf16.mxu0 0
    %820 = vmatpush2.bf16.msra.mxu0 0
    %821 = vmatprep.subr.bf16.mxu0 0
    %822 = vmatpush2.bf16.msra.mxu0 0
    %823 = vmatprep.subr.bf16.mxu0 0
    %824 = vmatpush2.bf16.msra.mxu0 0
    %825 = vmatprep.subr.bf16.mxu0 0
    %826 = vmatpush2.bf16.msra.mxu0 0
    %827 = vmatprep.mubr.bf16.mxu0 0
    %828 = vmatmul.mubr.bf16.gmra.mxu0 %v307
    %v829 = vpop.f32.mrf.mxu0
    %v830 = vadd.f32 %v769, %v829
    %v831 = vpop.f32.mrf.mxu0
    %v832 = vpop.f32.mrf.mxu0
    %v833 = vpop.f32.mrf.mxu0
    %834 = vdwg.mxu0
    %v835 = vmul.f32 %v425, %v425
    %v836 = vmul.f32 %v506, %v506
    %v837 = vadd.f32 %v835, %v836
    %v838 = vmul.f32 %v587, %v587
    %v839 = vadd.f32 %v837, %v838
    %v840 = vmax.f32 %v839, 1e-24
    %v841 = vrsqrt.pop %v840
    %v842 = vmul.f32 %v425, %v841
    %v843 = vmul.f32 %v506, %v841
    %v844 = vmul.f32 %v587, %v841
    %v845 = vmul.f32 %v842, %v668
    %v846 = vmul.f32 %v843, %v749
    %v847 = vadd.f32 %v845, %v846
    %v848 = vmul.f32 %v844, %v830
    %v849 = vadd.f32 %v847, %v848
    %v850 = vmul.f32 %v849, %v842
    %v851 = vsub.f32 %v668, %v850
    %v852 = vmul.f32 %v849, %v843
    %v853 = vsub.f32 %v749, %v852
    %v854 = vmul.f32 %v849, %v844
    %v855 = vsub.f32 %v830, %v854
    %v856 = vmul.f32 %v851, %v851
    %v857 = vmul.f32 %v853, %v853
    %v858 = vadd.f32 %v856, %v857
    %v859 = vmul.f32 %v855, %v855
    %v860 = vadd.f32 %v858, %v859
    %v861 = vmax.f32 %v860, 1e-24
    %v862 = vrsqrt.pop %v861
    %v863 = vmul.f32 %v851, %v862
    %v864 = vmul.f32 %v853, %v862
    %v865 = vmul.f32 %v855, %v862
    %v866 = vmul.f32 %v843, %v865
    %v867 = vmul.f32 %v844, %v864
    %v868 = vsub.f32 %v866, %v867
    %v869 = vmul.f32 %v844, %v863
    %v870 = vmul.f32 %v842, %v865
    %v871 = vsub.f32 %v869, %v870
    %v872 = vmul.f32 %v842, %v864
    %v873 = vmul.f32 %v843, %v863
    %v874 = vsub.f32 %v872, %v873
    %vm875 = vcmask 48128
    %876 = vst.msk [vmem:[%s9] sm:$0xff] %vm875, %v842
    %877 = vst.msk [vmem:[%s9 + $0x8] sm:$0xff] %vm875, %v863
    %878 = vst.msk [vmem:[%s9 + $0x10] sm:$0xff] %vm875, %v868
    %879 = vst.msk [vmem:[%s9 + $0x18] sm:$0xff] %vm875, %v843
    %880 = vst.msk [vmem:[%s9 + $0x20] sm:$0xff] %vm875, %v864
    %881 = vst.msk [vmem:[%s9 + $0x28] sm:$0xff] %vm875, %v871
    %882 = vst.msk [vmem:[%s9 + $0x30] sm:$0xff] %vm875, %v844
    %883 = vst.msk [vmem:[%s9 + $0x38] sm:$0xff] %vm875, %v865
    %884 = vst.msk [vmem:[%s9 + $0x40] sm:$0xff] %vm875, %v874
    // Predicated region
    $region34: #{rotnet_forward.1} parent=1 // pred_check
      _
    $region35: #{rotnet_forward.1} parent=1 // pred_check_branch
      %886 = sbr.rel (0) target = $region37
    $region36: #{rotnet_forward.1} parent=1 // pred_region
      %s888 = ssub.s32 128, 128
      %889 = vsyncadd [#allocation3], %s888
      %s891 = sshll.u32 [#allocation2], 4
      %s892 = int_to_ptr.vmem [resolvable:$true] %s891
      %894 = dma.vmem_to_hbm [thread:$0]  %s892, 128, %s8, [#allocation3]
    $region37: #{rotnet_forward.1} parent=1 // pred_fallthru
      _
    // Predicated region
    $region38: #{rotnet_forward.1} parent=1 // pred_check
      _
    $region39: #{rotnet_forward.1} parent=1 // pred_check_branch
      %896 = sbr.rel (0) target = $region41
    $region40: #{rotnet_forward.1} parent=1 // pred_region
      _
    $region41: #{rotnet_forward.1} parent=1 // pred_fallthru
      _
    // Predicated region
    $region42: #{rotnet_forward.1} parent=1 // pred_check
      _
    $region43: #{rotnet_forward.1} parent=1 // pred_check_branch
      %898 = sbr.rel (0) target = $region45
    $region44: #{rotnet_forward.1} parent=1 // pred_region
      %899 = dma.done [#allocation3], 128
    $region45: #{rotnet_forward.1} parent=1 // pred_fallthru
      _
    // Predicated region
    $region46: #{rotnet_forward.1} parent=1 // pred_check
      _
    $region47: #{rotnet_forward.1} parent=1 // pred_check_branch
      %901 = sbr.rel (0) target = $region49
    $region48: #{rotnet_forward.1} parent=1 // pred_region
      _
    $region49: #{rotnet_forward.1} parent=1 // pred_fallthru
      _
    %902 = vsyncpa [#allocation3], 1

</llo_original>
